<compile_context>
chip_gen: v7x
topology: tpu7x:2x2x1
jax: 0.10.0
libtpu: 0.0.40
codegen_flags: <defaults>
</compile_context>

<pallas_src>
import functools

import jax
import jax.numpy as jnp
import numpy as np
from jax.experimental import pallas as pl
from jax.experimental.pallas import tpu as pltpu

_L = 128  # lanes


# --------------------------------------------------------------------------
# small static helpers
# --------------------------------------------------------------------------
def _int_pow(x, n):
    """x ** n for a static integer n >= 1 via repeated multiplies (VPU only)."""
    acc = None
    base = x
    while n > 0:
        if n & 1:
            acc = base if acc is None else acc * base
        n >>= 1
        if n:
            base = base * base
    return jnp.ones_like(x) if acc is None else acc


def _modulate(logpt, at, gamma):
    """loss = -(1 - pt)**gamma * (alpha_t * logpt), torch op ordering."""
    scaled = logpt if at is None else logpt * at
    g = float(gamma)
    if g == 0.0:                      # fast path: no pt / pow needed
        return -scaled
    pt = jnp.exp(logpt)               # pt comes from the *unscaled* logpt
    w = 1.0 - pt
    if g.is_integer() and g > 0:
        focal = _int_pow(w, int(g))   # VPU multiplies only
    else:
        focal = jnp.power(w, jnp.float32(g))   # EUP fallback
    return -focal * scaled


def _normalize_alpha(alpha, num_classes):
    if alpha is None:
        return None
    if isinstance(alpha, (float, int)) and not isinstance(alpha, bool):
        vals = (float(alpha), 1.0 - float(alpha))      # mirrors the torch quirk
    else:
        vals = tuple(float(v) for v in np.asarray(alpha).reshape(-1))
    if len(vals) != num_classes:
        raise ValueError(
            f"alpha has {len(vals)} entries but input has {num_classes} classes")
    return vals


def _vmem_capacity_bytes():
    try:
        info = pltpu.get_tpu_info()
        cap = getattr(info, "vmem_capacity_bytes", None)
        if cap:
            return int(cap)
    except Exception:
        pass
    return 64 * 1024 * 1024           # conservative (v7x per-TensorCore)


def _largest_divisor_leq(n, cap):
    for d in range(min(n, max(1, cap)), 0, -1):
        if n % d == 0:
            return d
    return 1


# --------------------------------------------------------------------------
# kernel
# --------------------------------------------------------------------------
def _focal_loss_kernel(x_ref, t_ref, out_ref, *, gamma, alpha, num_classes,
                       hw, bn, flat, tile_rows, tile_sp, tail_mask, use_sub8):
    # aligned layout: x_ref (BN, C, TR, 128), t_ref (BN, TR, 128)
    # flat layout   : x_ref (BN, C, TILE),    t_ref (BN, 1, TILE)
    # out_ref       : (8, 128) f32 partial sums for this grid step.
    #
    # Note: out-of-range target values do not error (unlike torch.gather);
    # they contribute with x[target]-m == 0 (and alpha_t == 0 when alpha is
    # given).  Padded / out-of-bounds spatial positions are masked out.
    C = num_classes
    s_i = pl.program_id(1)

    out_ref[...] = jnp.zeros_like(out_ref)

    if not use_sub8:
        r8 = jax.lax.broadcasted_iota(jnp.int32, (8, _L), 0)
        l8 = jax.lax.broadcasted_iota(jnp.int32, (8, _L), 1)
        at00 = (r8 == 0) & (l8 == 0)

    def accumulate(loss):
        if use_sub8:
            # sublane-aligned partial reduce: layout-preserving reshape + VPU adds
            out_ref[...] += jnp.sum(
                loss.reshape(tile_rows // 8, 8, _L), axis=0)
        else:
            out_ref[...] += jnp.where(at00, jnp.sum(loss), 0.0)

    def block_positions(shape):
        # flat spatial index of each loss element within this s-tile
        # (int32: fine for any realistic H*W < 2**31).
        if flat:
            return jax.lax.broadcasted_iota(jnp.int32, shape, 1)
        row = jax.lax.broadcasted_iota(jnp.int32, shape, 0)
        lane = jax.lax.broadcasted_iota(jnp.int32, shape, 1)
        return row * _L + lane

    # TODO(synk): for very large C (>~64) switch the per-class Python loops to
    # lax.fori_loop(..., unroll=8) to cap the Mosaic program size.
    for b in range(bn):
        if flat:
            xb = x_ref[b].astype(jnp.float32)              # (C, TILE)
            tb = t_ref[b].astype(jnp.int32)                # (1, TILE)
            m = jnp.max(xb, axis=0, keepdims=True)         # (1, TILE)
            z = xb - m                                     # (C, TILE)
            ssum = jnp.sum(jnp.exp(z), axis=0, keepdims=True)
            z_t = jnp.zeros_like(m)
            at = jnp.zeros_like(m) if alpha is not None else None
            for c in range(C):
                sel = tb == c
                z_t = jnp.where(sel, z[c:c + 1, :], z_t)
                if alpha is not None:
                    at = jnp.where(sel, jnp.float32(alpha[c]), at)
        else:
            tb = t_ref[b].astype(jnp.int32)                # (TR, 128)
            # max over classes: elementwise, unrolled over the C rows
            m = x_ref[b, 0].astype(jnp.float32)
            for c in range(1, C):
                m = jnp.maximum(m, x_ref[b, c].astype(jnp.float32))
            # fused: sum(exp(x-m)), gather x[target]-m, gather alpha[target]
            ssum = jnp.zeros_like(m)
            z_t = jnp.zeros_like(m)
            at = jnp.zeros_like(m) if alpha is not None else None
            for c in range(C):
                z = x_ref[b, c].astype(jnp.float32) - m
                ssum = ssum + jnp.exp(z)
                sel = tb == c
                z_t = jnp.where(sel, z, z_t)
                if alpha is not None:
                    at = jnp.where(sel, jnp.float32(alpha[c]), at)

        logpt = z_t - jnp.log(ssum)                        # log p_target
        loss = _modulate(logpt, at, gamma)                 # spatial-shaped

        if tail_mask:
            is_tail = s_i == pl.num_programs(1) - 1
            # only the tail tile pays the iota/compare/select mask

            @pl.when(is_tail)
            def _(loss=loss):
                pos = s_i * tile_sp + block_positions(loss.shape)
                accumulate(jnp.where(pos < hw, loss, 0.0))

            @pl.when(jnp.logical_not(is_tail))
            def _(loss=loss):
                accumulate(loss)
        else:
            accumulate(loss)


# --------------------------------------------------------------------------
# wrapper
# --------------------------------------------------------------------------
def focal_loss(logits, target, *, gamma=0.0, alpha=None, size_average=True):
    """Focal loss for (N, C, *spatial) float logits / (N, *spatial) int targets."""
    if logits.ndim < 2:
        raise ValueError("expected at least (N, C) logits")
    if logits.ndim == 2:
        # (B, C) rows-of-samples -> (1, C, B).
        # TODO(synk): a dedicated row-major kernel could avoid this transpose.
        logits = jnp.swapaxes(logits, 0, 1)[None]
        target = target.reshape(1, -1)

    N, C = int(logits.shape[0]), int(logits.shape[1])
    HW = int(np.prod(logits.shape[2:]))
    alpha_t = _normalize_alpha(alpha, C)

    # ---- free reshapes of the native NCHW layout (no transpose, no pad) ----
    x = logits.reshape(N, C, HW)
    t = target.reshape(N, HW)
    if (not jnp.issubdtype(t.dtype, jnp.integer)) or t.dtype.itemsize > 4:
        t = t.astype(jnp.int32)
    # (narrow int8/int16 targets are kept native and upcast inside the kernel)

    x_bytes = x.dtype.itemsize
    t_bytes = t.dtype.itemsize

    # ---- generation-aware VMEM budget ---------------------------------------
    phys_vmem = _vmem_capacity_bytes()          # 128 MiB v5e/v6e, 64 MiB v7x
    budget = phys_vmem // 2                     # dbuf inputs + f32 temporaries
    vmem_limit = phys_vmem * 3 // 4

    hw_valid = HW
    flat = (HW % _L != 0) and (HW >= _L)

    if not flat:
        # aligned layout (N, C, R, 128); tiny HW < 128 pads a handful of elems
        if HW % _L != 0:
            pad = _L - HW
            x = jnp.pad(x, ((0, 0), (0, 0), (0, pad)))
            t = jnp.pad(t, ((0, 0), (0, pad)))
        R = x.shape[-1] // _L
        x = x.reshape(N, C, R, _L)
        t = t.reshape(N, R, _L)

        # bytes per spatial position: 2x double-buffered inputs + ~10 f32 temps
        per_pos = 2 * (C * x_bytes + t_bytes) + 4 * 10
        rows_cap = max(1, budget // (per_pos * _L))
        if rows_cap >= R:
            TR = R                                        # whole image per step
            BN = _largest_divisor_leq(N, max(1, rows_cap // max(R, 1)))
        else:
            TR = max(8, (rows_cap // 32) * 32)            # 32: also fits int8 t
            TR = min(TR, R)
            BN = 1
        grid_s = pl.cdiv(R, TR)
        tile_sp = TR * _L
        tail_mask = (R % TR != 0) or (R * _L != hw_valid)
        use_sub8 = (TR % 8 == 0)
        in_specs = [
            pl.BlockSpec((BN, C, TR, _L), lambda b, s: (b, 0, s, 0)),
            pl.BlockSpec((BN, TR, _L), lambda b, s: (b, s, 0)),
        ]
        tr_kw = TR
    else:
        # ragged HW: flat layout, partial tail block handled by Pallas + mask
        t = t.reshape(N, 1, HW)
        per_pos = 2 * (C * x_bytes + t_bytes) + 4 * (3 * C + 10)
        pos_cap = max(_L, budget // per_pos)
        tile_cap = (HW // _L) * _L
        TILE = min(tile_cap, max(_L, (pos_cap // _L) * _L))
        if TILE >= tile_cap:
            TILE = tile_cap
            BN = _largest_divisor_leq(N, max(1, pos_cap // max(TILE, 1)))
        else:
            BN = 1
        grid_s = pl.cdiv(HW, TILE)
        tile_sp = TILE
        tail_mask = (HW % TILE != 0)
        use_sub8 = False
        in_specs = [
            pl.BlockSpec((BN, C, TILE), lambda b, s: (b, 0, s)),
            pl.BlockSpec((BN, 1, TILE), lambda b, s: (b, 0, s)),
        ]
        tr_kw = 0

    grid_n = N // BN
    out_shape = jax.ShapeDtypeStruct((grid_n * 8, grid_s * _L), jnp.float32)

    kernel = functools.partial(
        _focal_loss_kernel, gamma=float(gamma), alpha=alpha_t, num_classes=C,
        hw=hw_valid, bn=BN, flat=flat, tile_rows=tr_kw, tile_sp=tile_sp,
        tail_mask=tail_mask, use_sub8=use_sub8)

    n_pos = N * HW
    cost = pl.CostEstimate(
        flops=int(n_pos * (8 * C + 16)),
        transcendentals=int(n_pos * (C + 2)),
        bytes_accessed=int(x.size * x_bytes + t.size * t_bytes
                           + grid_n * 8 * grid_s * _L * 4))

    partials = pl.pallas_call(
        kernel,
        out_shape=out_shape,
        grid_spec=pltpu.PrefetchScalarGridSpec(
            num_scalar_prefetch=0,
            grid=(grid_n, grid_s),
            in_specs=in_specs,
            out_specs=pl.BlockSpec((8, _L), lambda b, s: (b, s)),
        ),
        compiler_params=pltpu.CompilerParams(
            # each (b, s) writes a disjoint output block -> both axes parallel
            # (lets v7x shard the grid across its 2 TensorCores).
            dimension_semantics=("parallel", "parallel"),
            vmem_limit_bytes=int(vmem_limit),
        ),
        cost_estimate=cost,
    )(x, t)

    total = jnp.sum(partials)
    if size_average:
        return total / jnp.float32(N * HW)
    return total


# --------------------------------------------------------------------------
# pure-JAX reference (mirrors the PyTorch module)
# --------------------------------------------------------------------------
def _focal_loss_ref(logits, target, *, gamma, alpha, size_average):
    N, C = logits.shape[0], logits.shape[1]
    if logits.ndim > 2:
        x = jnp.moveaxis(logits.reshape(N, C, -1), 1, 2).reshape(-1, C)
    else:
        x = logits
    x = x.astype(jnp.float32)
    tt = target.reshape(-1).astype(jnp.int32)
    logp = jax.nn.log_softmax(x, axis=1)
    logpt = jnp.take_along_axis(logp, tt[:, None], axis=1)[:, 0]
    pt = jnp.exp(logpt)
    if alpha is not None:
        if isinstance(alpha, (float, int)):
            a = jnp.array([alpha, 1.0 - alpha], jnp.float32)
        else:
            a = jnp.asarray(alpha, jnp.float32)
        logpt = logpt * a[tt]
    loss = -1.0 * (1.0 - pt) ** gamma * logpt
    return loss.mean() if size_average else loss.sum()


if __name__ == "__main__":
    key = jax.random.PRNGKey(0)
    ks = jax.random.split(key, 8)

    # Case 1: per-class alpha, gamma=2 (integer fast path), aligned spatial.
    N, C, H, W = 2, 4, 16, 16
    gamma1, alpha1 = 2.0, [0.1, 0.2, 0.3, 0.4]
    logits1 = jax.random.normal(ks[0], (N, C, H, W), jnp.float32)
    target1 = jax.random.randint(ks[1], (N, H, W), 0, C, jnp.int32)
    out1 = jax.block_until_ready(
        focal_loss(logits1, target1, gamma=gamma1, alpha=alpha1,
                   size_average=True))
    ref1 = _focal_loss_ref(logits1, target1, gamma=gamma1, alpha=alpha1,
                           size_average=True)
    assert jnp.allclose(out1, ref1, rtol=1e-5, atol=1e-5), (out1, ref1)

    # Case 2: ragged spatial (flat path, pl.when tail mask), gamma=0 fast path.
    N2, C2, H2, W2 = 2, 3, 9, 15
    logits2 = jax.random.normal(ks[2], (N2, C2, H2, W2), jnp.float32)
    target2 = jax.random.randint(ks[3], (N2, H2, W2), 0, C2, jnp.int32)
    out2 = jax.block_until_ready(
        focal_loss(logits2, target2, gamma=0.0, alpha=None,
                   size_average=False))
    ref2 = _focal_loss_ref(logits2, target2, gamma=0.0, alpha=None,
                           size_average=False)
    assert jnp.allclose(out2, ref2, rtol=1e-5, atol=1e-5), (out2, ref2)

    # Case 3: scalar alpha quirk (alpha -> [a, 1-a]) with C=2, gamma=1.
    N3, C3 = 2, 2
    logits3 = jax.random.normal(ks[4], (N3, C3, 16, 16), jnp.float32)
    target3 = jax.random.randint(ks[5], (N3, 16, 16), 0, C3, jnp.int32)
    out3 = jax.block_until_ready(
        focal_loss(logits3, target3, gamma=1.0, alpha=0.25,
                   size_average=True))
    ref3 = _focal_loss_ref(logits3, target3, gamma=1.0, alpha=0.25,
                           size_average=True)
    assert jnp.allclose(out3, ref3, rtol=1e-5, atol=1e-5), (out3, ref3)

    # Case 4: bf16 logits, larger aligned spatial (sublane-aligned reduce path).
    N4, C4, H4, W4 = 2, 4, 64, 64
    logits4 = jax.random.normal(ks[6], (N4, C4, H4, W4), jnp.bfloat16)
    target4 = jax.random.randint(ks[7], (N4, H4, W4), 0, C4, jnp.int32)
    out4 = jax.block_until_ready(
        focal_loss(logits4, target4, gamma=2.0, alpha=None,
                   size_average=True))
    ref4 = _focal_loss_ref(logits4, target4, gamma=2.0, alpha=None,
                           size_average=True)
    assert jnp.allclose(out4, ref4, rtol=1e-4, atol=1e-5), (out4, ref4)

    print("KERNEL_OK")
</pallas_src>

<mosaic_0001>
module attributes {stable_mosaic.version = 11 : i64} {
  func.func @_focal_loss_kernel(%arg0: i32, %arg1: i32, %arg2: memref<2x4x2x128xf32, #tpu.memory_space<vmem>>, %arg3: memref<2x2x128xi32, #tpu.memory_space<vmem>>, %arg4: memref<8x128xf32, #tpu.memory_space<vmem>>) attributes {dimension_semantics = [#tpu.dimension_semantics<parallel>, #tpu.dimension_semantics<parallel>], iteration_bounds = array<i64: 1, 1>, scalar_prefetch = 0 : i64, scratch_operands = 0 : i64, tpu.core_type = #tpu.core_type<tc>, window_params = [{transform_indices = @transform_0, window_bounds = array<i64: 2, 4, 2, 128>}, {transform_indices = @transform_1, window_bounds = array<i64: 2, 2, 128>}, {transform_indices = @transform_2, window_bounds = array<i64: 8, 128>}]} {
    %cst = arith.constant 0.000000e+00 : f32
    %0 = vector.broadcast %cst : f32 to vector<8x128xf32>
    %c0 = arith.constant 0 : index
    %c0_0 = arith.constant 0 : index
    %1 = vector.load %arg4[%c0, %c0_0] : memref<8x128xf32, #tpu.memory_space<vmem>>, vector<8x128xf32>
    tpu.vector_store %arg4[%c0, %c0_0], %0 {strides = array<i32>} : memref<8x128xf32, #tpu.memory_space<vmem>>, vector<8x128xf32>,
    %2 = tpu.iota {dimensions = array<i32: 0>} : vector<8x128xi32>
    %3 = tpu.iota {dimensions = array<i32: 1>} : vector<8x128xi32>
    %c0_i32 = arith.constant 0 : i32
    %4 = vector.broadcast %c0_i32 : i32 to vector<8x128xi32>
    %5 = arith.cmpi eq, %2, %4 : vector<8x128xi32>
    %c0_i32_1 = arith.constant 0 : i32
    %6 = vector.broadcast %c0_i32_1 : i32 to vector<8x128xi32>
    %7 = arith.cmpi eq, %3, %6 : vector<8x128xi32>
    %8 = arith.andi %5, %7 : vector<8x128xi1>
    %c0_2 = arith.constant 0 : index
    %c0_3 = arith.constant 0 : index
    %c0_4 = arith.constant 0 : index
    %9 = vector.load %arg3[%c0_2, %c0_3, %c0_4] : memref<2x2x128xi32, #tpu.memory_space<vmem>>, vector<1x2x128xi32>
    %10 = vector.shape_cast %9 : vector<1x2x128xi32> to vector<2x128xi32>
    %c0_5 = arith.constant 0 : index
    %c0_6 = arith.constant 0 : index
    %c0_7 = arith.constant 0 : index
    %c0_8 = arith.constant 0 : index
    %11 = vector.load %arg2[%c0_5, %c0_6, %c0_7, %c0_8] : memref<2x4x2x128xf32, #tpu.memory_space<vmem>>, vector<1x1x2x128xf32>
    %12 = vector.shape_cast %11 : vector<1x1x2x128xf32> to vector<2x128xf32>
    %c0_9 = arith.constant 0 : index
    %c1 = arith.constant 1 : index
    %c0_10 = arith.constant 0 : index
    %c0_11 = arith.constant 0 : index
    %13 = vector.load %arg2[%c0_9, %c1, %c0_10, %c0_11] : memref<2x4x2x128xf32, #tpu.memory_space<vmem>>, vector<1x1x2x128xf32>
    %14 = vector.shape_cast %13 : vector<1x1x2x128xf32> to vector<2x128xf32>
    %15 = arith.maximumf %12, %14 : vector<2x128xf32>
    %c0_12 = arith.constant 0 : index
    %c2 = arith.constant 2 : index
    %c0_13 = arith.constant 0 : index
    %c0_14 = arith.constant 0 : index
    %16 = vector.load %arg2[%c0_12, %c2, %c0_13, %c0_14] : memref<2x4x2x128xf32, #tpu.memory_space<vmem>>, vector<1x1x2x128xf32>
    %17 = vector.shape_cast %16 : vector<1x1x2x128xf32> to vector<2x128xf32>
    %18 = arith.maximumf %15, %17 : vector<2x128xf32>
    %c0_15 = arith.constant 0 : index
    %c3 = arith.constant 3 : index
    %c0_16 = arith.constant 0 : index
    %c0_17 = arith.constant 0 : index
    %19 = vector.load %arg2[%c0_15, %c3, %c0_16, %c0_17] : memref<2x4x2x128xf32, #tpu.memory_space<vmem>>, vector<1x1x2x128xf32>
    %20 = vector.shape_cast %19 : vector<1x1x2x128xf32> to vector<2x128xf32>
    %21 = arith.maximumf %18, %20 : vector<2x128xf32>
    %cst_18 = arith.constant 0.000000e+00 : f32
    %22 = vector.broadcast %cst_18 : f32 to vector<2x128xf32>
    %cst_19 = arith.constant 0.000000e+00 : f32
    %23 = vector.broadcast %cst_19 : f32 to vector<2x128xf32>
    %cst_20 = arith.constant 0.000000e+00 : f32
    %24 = vector.broadcast %cst_20 : f32 to vector<2x128xf32>
    %c0_21 = arith.constant 0 : index
    %c0_22 = arith.constant 0 : index
    %c0_23 = arith.constant 0 : index
    %c0_24 = arith.constant 0 : index
    %25 = vector.load %arg2[%c0_21, %c0_22, %c0_23, %c0_24] : memref<2x4x2x128xf32, #tpu.memory_space<vmem>>, vector<1x1x2x128xf32>
    %26 = vector.shape_cast %25 : vector<1x1x2x128xf32> to vector<2x128xf32>
    %27 = arith.subf %26, %21 : vector<2x128xf32>
    %28 = math.exp %27 : vector<2x128xf32>
    %29 = arith.addf %22, %28 : vector<2x128xf32>
    %c0_i32_25 = arith.constant 0 : i32
    %30 = vector.broadcast %c0_i32_25 : i32 to vector<2x128xi32>
    %31 = arith.cmpi eq, %10, %30 : vector<2x128xi32>
    %32 = arith.select %31, %27, %23 : vector<2x128xi1>, vector<2x128xf32>
    %cst_26 = arith.constant 1.000000e-01 : f32
    %33 = vector.broadcast %cst_26 : f32 to vector<2x128xf32>
    %34 = arith.select %31, %33, %24 : vector<2x128xi1>, vector<2x128xf32>
    %c0_27 = arith.constant 0 : index
    %c1_28 = arith.constant 1 : index
    %c0_29 = arith.constant 0 : index
    %c0_30 = arith.constant 0 : index
    %35 = vector.load %arg2[%c0_27, %c1_28, %c0_29, %c0_30] : memref<2x4x2x128xf32, #tpu.memory_space<vmem>>, vector<1x1x2x128xf32>
    %36 = vector.shape_cast %35 : vector<1x1x2x128xf32> to vector<2x128xf32>
    %37 = arith.subf %36, %21 : vector<2x128xf32>
    %38 = math.exp %37 : vector<2x128xf32>
    %39 = arith.addf %29, %38 : vector<2x128xf32>
    %c1_i32 = arith.constant 1 : i32
    %40 = vector.broadcast %c1_i32 : i32 to vector<2x128xi32>
    %41 = arith.cmpi eq, %10, %40 : vector<2x128xi32>
    %42 = arith.select %41, %37, %32 : vector<2x128xi1>, vector<2x128xf32>
    %cst_31 = arith.constant 2.000000e-01 : f32
    %43 = vector.broadcast %cst_31 : f32 to vector<2x128xf32>
    %44 = arith.select %41, %43, %34 : vector<2x128xi1>, vector<2x128xf32>
    %c0_32 = arith.constant 0 : index
    %c2_33 = arith.constant 2 : index
    %c0_34 = arith.constant 0 : index
    %c0_35 = arith.constant 0 : index
    %45 = vector.load %arg2[%c0_32, %c2_33, %c0_34, %c0_35] : memref<2x4x2x128xf32, #tpu.memory_space<vmem>>, vector<1x1x2x128xf32>
    %46 = vector.shape_cast %45 : vector<1x1x2x128xf32> to vector<2x128xf32>
    %47 = arith.subf %46, %21 : vector<2x128xf32>
    %48 = math.exp %47 : vector<2x128xf32>
    %49 = arith.addf %39, %48 : vector<2x128xf32>
    %c2_i32 = arith.constant 2 : i32
    %50 = vector.broadcast %c2_i32 : i32 to vector<2x128xi32>
    %51 = arith.cmpi eq, %10, %50 : vector<2x128xi32>
    %52 = arith.select %51, %47, %42 : vector<2x128xi1>, vector<2x128xf32>
    %cst_36 = arith.constant 3.000000e-01 : f32
    %53 = vector.broadcast %cst_36 : f32 to vector<2x128xf32>
    %54 = arith.select %51, %53, %44 : vector<2x128xi1>, vector<2x128xf32>
    %c0_37 = arith.constant 0 : index
    %c3_38 = arith.constant 3 : index
    %c0_39 = arith.constant 0 : index
    %c0_40 = arith.constant 0 : index
    %55 = vector.load %arg2[%c0_37, %c3_38, %c0_39, %c0_40] : memref<2x4x2x128xf32, #tpu.memory_space<vmem>>, vector<1x1x2x128xf32>
    %56 = vector.shape_cast %55 : vector<1x1x2x128xf32> to vector<2x128xf32>
    %57 = arith.subf %56, %21 : vector<2x128xf32>
    %58 = math.exp %57 : vector<2x128xf32>
    %59 = arith.addf %49, %58 : vector<2x128xf32>
    %c3_i32 = arith.constant 3 : i32
    %60 = vector.broadcast %c3_i32 : i32 to vector<2x128xi32>
    %61 = arith.cmpi eq, %10, %60 : vector<2x128xi32>
    %62 = arith.select %61, %57, %52 : vector<2x128xi1>, vector<2x128xf32>
    %cst_41 = arith.constant 4.000000e-01 : f32
    %63 = vector.broadcast %cst_41 : f32 to vector<2x128xf32>
    %64 = arith.select %61, %63, %54 : vector<2x128xi1>, vector<2x128xf32>
    %65 = math.log %59 : vector<2x128xf32>
    %66 = arith.subf %62, %65 : vector<2x128xf32>
    %67 = arith.mulf %66, %64 : vector<2x128xf32>
    %68 = math.exp %66 : vector<2x128xf32>
    %cst_42 = arith.constant 1.000000e+00 : f32
    %69 = vector.broadcast %cst_42 : f32 to vector<2x128xf32>
    %70 = arith.subf %69, %68 : vector<2x128xf32>
    %71 = arith.mulf %70, %70 : vector<2x128xf32>
    %cst_43 = arith.constant 0.000000e+00 : f32
    %72 = vector.broadcast %cst_43 : f32 to vector<2x128xf32>
    %73 = arith.subf %72, %71 : vector<2x128xf32>
    %74 = arith.mulf %73, %67 : vector<2x128xf32>
    %c0_44 = arith.constant 0 : index
    %c0_45 = arith.constant 0 : index
    %75 = vector.load %arg4[%c0_44, %c0_45] : memref<8x128xf32, #tpu.memory_space<vmem>>, vector<8x128xf32>
    %76 = vector.shape_cast %74 : vector<2x128xf32> to vector<1x2x128xf32>
    %cst_46 = arith.constant dense<0.000000e+00> : vector<1xf32>
    %77 = vector.multi_reduction <add>, %76, %cst_46 [1, 2] : vector<1x2x128xf32> to vector<1xf32>
    %78 = vector.shape_cast %77 : vector<1xf32> to vector<1x1x1xf32>
    %79 = vector.extract %78[0, 0, 0] : f32 from vector<1x1x1xf32>
    %cst_47 = arith.constant 0.000000e+00 : f32
    %80 = vector.broadcast %79 : f32 to vector<8x128xf32>
    %81 = vector.broadcast %cst_47 : f32 to vector<8x128xf32>
    %82 = arith.select %8, %80, %81 : vector<8x128xi1>, vector<8x128xf32>
    %83 = arith.addf %75, %82 : vector<8x128xf32>
    %c0_48 = arith.constant 0 : index
    %c0_49 = arith.constant 0 : index
    %84 = vector.load %arg4[%c0_48, %c0_49] : memref<8x128xf32, #tpu.memory_space<vmem>>, vector<8x128xf32>
    tpu.vector_store %arg4[%c0_48, %c0_49], %83 {strides = array<i32>} : memref<8x128xf32, #tpu.memory_space<vmem>>, vector<8x128xf32>,
    %c1_50 = arith.constant 1 : index
    %c0_51 = arith.constant 0 : index
    %c0_52 = arith.constant 0 : index
    %85 = vector.load %arg3[%c1_50, %c0_51, %c0_52] : memref<2x2x128xi32, #tpu.memory_space<vmem>>, vector<1x2x128xi32>
    %86 = vector.shape_cast %85 : vector<1x2x128xi32> to vector<2x128xi32>
    %c1_53 = arith.constant 1 : index
    %c0_54 = arith.constant 0 : index
    %c0_55 = arith.constant 0 : index
    %c0_56 = arith.constant 0 : index
    %87 = vector.load %arg2[%c1_53, %c0_54, %c0_55, %c0_56] : memref<2x4x2x128xf32, #tpu.memory_space<vmem>>, vector<1x1x2x128xf32>
    %88 = vector.shape_cast %87 : vector<1x1x2x128xf32> to vector<2x128xf32>
    %c1_57 = arith.constant 1 : index
    %c1_58 = arith.constant 1 : index
    %c0_59 = arith.constant 0 : index
    %c0_60 = arith.constant 0 : index
    %89 = vector.load %arg2[%c1_57, %c1_58, %c0_59, %c0_60] : memref<2x4x2x128xf32, #tpu.memory_space<vmem>>, vector<1x1x2x128xf32>
    %90 = vector.shape_cast %89 : vector<1x1x2x128xf32> to vector<2x128xf32>
    %91 = arith.maximumf %88, %90 : vector<2x128xf32>
    %c1_61 = arith.constant 1 : index
    %c2_62 = arith.constant 2 : index
    %c0_63 = arith.constant 0 : index
    %c0_64 = arith.constant 0 : index
    %92 = vector.load %arg2[%c1_61, %c2_62, %c0_63, %c0_64] : memref<2x4x2x128xf32, #tpu.memory_space<vmem>>, vector<1x1x2x128xf32>
    %93 = vector.shape_cast %92 : vector<1x1x2x128xf32> to vector<2x128xf32>
    %94 = arith.maximumf %91, %93 : vector<2x128xf32>
    %c1_65 = arith.constant 1 : index
    %c3_66 = arith.constant 3 : index
    %c0_67 = arith.constant 0 : index
    %c0_68 = arith.constant 0 : index
    %95 = vector.load %arg2[%c1_65, %c3_66, %c0_67, %c0_68] : memref<2x4x2x128xf32, #tpu.memory_space<vmem>>, vector<1x1x2x128xf32>
    %96 = vector.shape_cast %95 : vector<1x1x2x128xf32> to vector<2x128xf32>
    %97 = arith.maximumf %94, %96 : vector<2x128xf32>
    %cst_69 = arith.constant 0.000000e+00 : f32
    %98 = vector.broadcast %cst_69 : f32 to vector<2x128xf32>
    %cst_70 = arith.constant 0.000000e+00 : f32
    %99 = vector.broadcast %cst_70 : f32 to vector<2x128xf32>
    %cst_71 = arith.constant 0.000000e+00 : f32
    %100 = vector.broadcast %cst_71 : f32 to vector<2x128xf32>
    %c1_72 = arith.constant 1 : index
    %c0_73 = arith.constant 0 : index
    %c0_74 = arith.constant 0 : index
    %c0_75 = arith.constant 0 : index
    %101 = vector.load %arg2[%c1_72, %c0_73, %c0_74, %c0_75] : memref<2x4x2x128xf32, #tpu.memory_space<vmem>>, vector<1x1x2x128xf32>
    %102 = vector.shape_cast %101 : vector<1x1x2x128xf32> to vector<2x128xf32>
    %103 = arith.subf %102, %97 : vector<2x128xf32>
    %104 = math.exp %103 : vector<2x128xf32>
    %105 = arith.addf %98, %104 : vector<2x128xf32>
    %c0_i32_76 = arith.constant 0 : i32
    %106 = vector.broadcast %c0_i32_76 : i32 to vector<2x128xi32>
    %107 = arith.cmpi eq, %86, %106 : vector<2x128xi32>
    %108 = arith.select %107, %103, %99 : vector<2x128xi1>, vector<2x128xf32>
    %cst_77 = arith.constant 1.000000e-01 : f32
    %109 = vector.broadcast %cst_77 : f32 to vector<2x128xf32>
    %110 = arith.select %107, %109, %100 : vector<2x128xi1>, vector<2x128xf32>
    %c1_78 = arith.constant 1 : index
    %c1_79 = arith.constant 1 : index
    %c0_80 = arith.constant 0 : index
    %c0_81 = arith.constant 0 : index
    %111 = vector.load %arg2[%c1_78, %c1_79, %c0_80, %c0_81] : memref<2x4x2x128xf32, #tpu.memory_space<vmem>>, vector<1x1x2x128xf32>
    %112 = vector.shape_cast %111 : vector<1x1x2x128xf32> to vector<2x128xf32>
    %113 = arith.subf %112, %97 : vector<2x128xf32>
    %114 = math.exp %113 : vector<2x128xf32>
    %115 = arith.addf %105, %114 : vector<2x128xf32>
    %c1_i32_82 = arith.constant 1 : i32
    %116 = vector.broadcast %c1_i32_82 : i32 to vector<2x128xi32>
    %117 = arith.cmpi eq, %86, %116 : vector<2x128xi32>
    %118 = arith.select %117, %113, %108 : vector<2x128xi1>, vector<2x128xf32>
    %cst_83 = arith.constant 2.000000e-01 : f32
    %119 = vector.broadcast %cst_83 : f32 to vector<2x128xf32>
    %120 = arith.select %117, %119, %110 : vector<2x128xi1>, vector<2x128xf32>
    %c1_84 = arith.constant 1 : index
    %c2_85 = arith.constant 2 : index
    %c0_86 = arith.constant 0 : index
    %c0_87 = arith.constant 0 : index
    %121 = vector.load %arg2[%c1_84, %c2_85, %c0_86, %c0_87] : memref<2x4x2x128xf32, #tpu.memory_space<vmem>>, vector<1x1x2x128xf32>
    %122 = vector.shape_cast %121 : vector<1x1x2x128xf32> to vector<2x128xf32>
    %123 = arith.subf %122, %97 : vector<2x128xf32>
    %124 = math.exp %123 : vector<2x128xf32>
    %125 = arith.addf %115, %124 : vector<2x128xf32>
    %c2_i32_88 = arith.constant 2 : i32
    %126 = vector.broadcast %c2_i32_88 : i32 to vector<2x128xi32>
    %127 = arith.cmpi eq, %86, %126 : vector<2x128xi32>
    %128 = arith.select %127, %123, %118 : vector<2x128xi1>, vector<2x128xf32>
    %cst_89 = arith.constant 3.000000e-01 : f32
    %129 = vector.broadcast %cst_89 : f32 to vector<2x128xf32>
    %130 = arith.select %127, %129, %120 : vector<2x128xi1>, vector<2x128xf32>
    %c1_90 = arith.constant 1 : index
    %c3_91 = arith.constant 3 : index
    %c0_92 = arith.constant 0 : index
    %c0_93 = arith.constant 0 : index
    %131 = vector.load %arg2[%c1_90, %c3_91, %c0_92, %c0_93] : memref<2x4x2x128xf32, #tpu.memory_space<vmem>>, vector<1x1x2x128xf32>
    %132 = vector.shape_cast %131 : vector<1x1x2x128xf32> to vector<2x128xf32>
    %133 = arith.subf %132, %97 : vector<2x128xf32>
    %134 = math.exp %133 : vector<2x128xf32>
    %135 = arith.addf %125, %134 : vector<2x128xf32>
    %c3_i32_94 = arith.constant 3 : i32
    %136 = vector.broadcast %c3_i32_94 : i32 to vector<2x128xi32>
    %137 = arith.cmpi eq, %86, %136 : vector<2x128xi32>
    %138 = arith.select %137, %133, %128 : vector<2x128xi1>, vector<2x128xf32>
    %cst_95 = arith.constant 4.000000e-01 : f32
    %139 = vector.broadcast %cst_95 : f32 to vector<2x128xf32>
    %140 = arith.select %137, %139, %130 : vector<2x128xi1>, vector<2x128xf32>
    %141 = math.log %135 : vector<2x128xf32>
    %142 = arith.subf %138, %141 : vector<2x128xf32>
    %143 = arith.mulf %142, %140 : vector<2x128xf32>
    %144 = math.exp %142 : vector<2x128xf32>
    %cst_96 = arith.constant 1.000000e+00 : f32
    %145 = vector.broadcast %cst_96 : f32 to vector<2x128xf32>
    %146 = arith.subf %145, %144 : vector<2x128xf32>
    %147 = arith.mulf %146, %146 : vector<2x128xf32>
    %cst_97 = arith.constant 0.000000e+00 : f32
    %148 = vector.broadcast %cst_97 : f32 to vector<2x128xf32>
    %149 = arith.subf %148, %147 : vector<2x128xf32>
    %150 = arith.mulf %149, %143 : vector<2x128xf32>
    %c0_98 = arith.constant 0 : index
    %c0_99 = arith.constant 0 : index
    %151 = vector.load %arg4[%c0_98, %c0_99] : memref<8x128xf32, #tpu.memory_space<vmem>>, vector<8x128xf32>
    %152 = vector.shape_cast %150 : vector<2x128xf32> to vector<1x2x128xf32>
    %cst_100 = arith.constant dense<0.000000e+00> : vector<1xf32>
    %153 = vector.multi_reduction <add>, %152, %cst_100 [1, 2] : vector<1x2x128xf32> to vector<1xf32>
    %154 = vector.shape_cast %153 : vector<1xf32> to vector<1x1x1xf32>
    %155 = vector.extract %154[0, 0, 0] : f32 from vector<1x1x1xf32>
    %cst_101 = arith.constant 0.000000e+00 : f32
    %156 = vector.broadcast %155 : f32 to vector<8x128xf32>
    %157 = vector.broadcast %cst_101 : f32 to vector<8x128xf32>
    %158 = arith.select %8, %156, %157 : vector<8x128xi1>, vector<8x128xf32>
    %159 = arith.addf %151, %158 : vector<8x128xf32>
    %c0_102 = arith.constant 0 : index
    %c0_103 = arith.constant 0 : index
    %160 = vector.load %arg4[%c0_102, %c0_103] : memref<8x128xf32, #tpu.memory_space<vmem>>, vector<8x128xf32>
    tpu.vector_store %arg4[%c0_102, %c0_103], %159 {strides = array<i32>} : memref<8x128xf32, #tpu.memory_space<vmem>>, vector<8x128xf32>,
    return
  }
  func.func @transform_0(%arg0: i32, %arg1: i32) -> (i32, i32, i32, i32) {
    %c0_i32 = arith.constant 0 : i32
    %c0_i32_0 = arith.constant 0 : i32
    %c0_i32_1 = arith.constant 0 : i32
    return %arg0, %c0_i32, %arg1, %c0_i32_0 : i32, i32, i32, i32
  }
  func.func @transform_1(%arg0: i32, %arg1: i32) -> (i32, i32, i32) {
    %c0_i32 = arith.constant 0 : i32
    %c0_i32_0 = arith.constant 0 : i32
    return %arg0, %arg1, %c0_i32 : i32, i32, i32
  }
  func.func @transform_2(%arg0: i32, %arg1: i32) -> (i32, i32) {
    %c0_i32 = arith.constant 0 : i32
    return %arg0, %arg1 : i32, i32
  }
}

</mosaic_0001>

<llo_original>
// kernel: tpu_custom_call.1
$region0: #{tpu_custom_call.1}
  #allocation0 [shape = 'u32[]', space=smem, size = 0x4, offset = 0x4, fixed_abs, tag = 'smem constant byte address 0x4 - core index']
  #allocation1 [shape = 'u32[144,128]{1,0:T(1,128)}', space=vmem, size = 0x12000, scoped, tag = 'internal scratch']
  %s0 = inlined_call_operand.hbm [shape: f32[2,4,2,128], index: 0, kind: input, shape index: {}]
  %s1 = inlined_call_operand.hbm [shape: s32[2,2,128], index: 1, kind: input, shape index: {}]
  %s2 = inlined_call_operand.hbm [shape: f32[8,128], index: 2, kind: output, shape index: {}]
  %s3 = sld [smem:[#allocation0]]
  $region26: #{tpu_custom_call.1} parent=0
    _
  %s5 = ssub.s32 1, %s3
  %s6 = scalar_select 0, %s5, %s3
  $region1: #{tpu_custom_call.1} parent=0
    #allocation2 [shape = 'u8[8192]{0}', space=vmem, size = 0x2000, scoped, tag = 'input window, operand 0, single buffered']
    #allocation3 [shape = 's32[1]{0}', space=sflag, size = 0x4, scoped, tag = 'scoped memory for tpu_custom_call.1']
    #allocation4 [shape = 's32[1]{0}', space=sflag, size = 0x4, scoped, tag = 'scoped memory for tpu_custom_call.1']
    #allocation5 [shape = 'u8[2048]{0}', space=vmem, size = 0x800, scoped, tag = 'input window, operand 1, single buffered']
    #allocation6 [shape = 's32[1]{0}', space=sflag, size = 0x4, scoped, tag = 'scoped memory for tpu_custom_call.1']
    #allocation7 [shape = 'u8[4096]{0}', space=vmem, size = 0x1000, scoped, tag = 'output window, operand 0, single buffered']
    %7 = vsyncpa [#allocation3], 0
    %8 = vsyncpa [#allocation6], 0
    %9 = vsyncpa [#allocation4], 0
    // Predicated region
    $region2: #{tpu_custom_call.1} parent=1 // pred_check
      _
    $region3: #{tpu_custom_call.1} parent=1 // pred_check_branch
      %11 = sbr.rel (0) target = $region5
    $region4: #{tpu_custom_call.1} parent=1 // pred_region
      %s13 = ssub.s32 256, 256
      %14 = vsyncadd [#allocation3], %s13
      %s15 = sshll.u32 [#allocation2], 4
      %s16 = int_to_ptr.vmem [resolvable:$true] %s15
      %21 = dma.hbm_to_vmem [thread:$0]  %s0, 256, %s16, [#allocation3], 32, 32, 2
    $region5: #{tpu_custom_call.1} parent=1 // pred_fallthru
      _
    // Predicated region
    $region6: #{tpu_custom_call.1} parent=1 // pred_check
      _
    $region7: #{tpu_custom_call.1} parent=1 // pred_check_branch
      %23 = sbr.rel (0) target = $region9
    $region8: #{tpu_custom_call.1} parent=1 // pred_region
      %s25 = ssub.s32 64, 64
      %26 = vsyncadd [#allocation6], %s25
      %s27 = sshll.u32 [#allocation5], 4
      %s28 = int_to_ptr.vmem [resolvable:$true] %s27
      %33 = dma.hbm_to_vmem [thread:$0]  %s1, 64, %s28, [#allocation6], 32, 32, 2
    $region9: #{tpu_custom_call.1} parent=1 // pred_fallthru
      _
    // Predicated region
    $region10: #{tpu_custom_call.1} parent=1 // pred_check
      _
    $region11: #{tpu_custom_call.1} parent=1 // pred_check_branch
      %35 = sbr.rel (0) target = $region13
    $region12: #{tpu_custom_call.1} parent=1 // pred_region
      %36 = dma.done [#allocation3], 256
    $region13: #{tpu_custom_call.1} parent=1 // pred_fallthru
      _
    // Predicated region
    $region14: #{tpu_custom_call.1} parent=1 // pred_check
      _
    $region15: #{tpu_custom_call.1} parent=1 // pred_check_branch
      %38 = sbr.rel (0) target = $region17
    $region16: #{tpu_custom_call.1} parent=1 // pred_region
      %39 = dma.done [#allocation6], 64
    $region17: #{tpu_custom_call.1} parent=1 // pred_fallthru
      _
    %40 = vst [vmem:[#allocation7] sm:$0xff] 0.0
    %v41 = vlaneseq
    %v42 = vshrl.u32 %v41, 7
    %v43 = vlaneseq
    %v44 = vand.u32 %v43, 127
    %vm45 = vcmp.eq.s32.totalorder %v42, 0
    %vm46 = vcmp.eq.s32.totalorder %v44, 0
    %vm47 = vmand %vm45, %vm46
    %v48 = vld [vmem:[#allocation5] sm:$0x3]
    %v49 = vld [vmem:[#allocation2] sm:$0x3]
    %s50 = scalar_lea.vmem [#allocation2], 2
    %v51 = vld [vmem:[%s50] sm:$0x3]
    %v52 = vmax.f32 %v49, %v51
    %s53 = scalar_lea.vmem [#allocation2], 4
    %v54 = vld [vmem:[%s53] sm:$0x3]
    %v55 = vmax.f32 %v52, %v54
    %s56 = scalar_lea.vmem [#allocation2], 6
    %v57 = vld [vmem:[%s56] sm:$0x3]
    %v58 = vmax.f32 %v55, %v57
    %v59 = vsub.f32 %v49, %v58
    %v60 = vmul.f32 %v59, 1.442695
    %v61 = vpow.pop %v60
    %v62 = vadd.f32 %v61, 0.0
    %vm63 = vcmp.eq.s32.totalorder %v48, 0
    %v64 = vsel %vm63, %v59, 0.0
    %v65 = vsel %vm63, 0.1, 0.0
    %v66 = vsub.f32 %v51, %v58
    %v67 = vmul.f32 %v66, 1.442695
    %v68 = vpow.pop %v67
    %v69 = vadd.f32 %v62, %v68
    %vm70 = vcmp.eq.s32.totalorder %v48, 1
    %v71 = vsel %vm70, %v66, %v64
    %v72 = vsel %vm70, 0.2, %v65
    %v73 = vsub.f32 %v54, %v58
    %v74 = vmul.f32 %v73, 1.442695
    %v75 = vpow.pop %v74
    %v76 = vadd.f32 %v69, %v75
    %vm77 = vcmp.eq.s32.totalorder %v48, 2
    %v78 = vsel %vm77, %v73, %v71
    %v79 = vsel %vm77, 0.3, %v72
    %v80 = vsub.f32 %v57, %v58
    %v81 = vmul.f32 %v80, 1.442695
    %v82 = vpow.pop %v81
    %v83 = vadd.f32 %v76, %v82
    %vm84 = vcmp.eq.s32.totalorder %v48, 3
    %v85 = vsel %vm84, %v80, %v78
    %v86 = vsel %vm84, 0.4, %v79
    %v87 = vlog2.pop %v83
    %v88 = vmul.f32 %v87, 0.6931472
    %v89 = vsub.f32 %v85, %v88
    %v90 = vmul.f32 %v89, %v86
    %v91 = vmul.f32 %v89, 1.442695
    %v92 = vpow.pop %v91
    %v93 = vsub.f32 1.0, %v92
    %v94 = vmul.f32 %v93, %v93
    %v95 = vsub.f32 0.0, %v94
    %v96 = vmul.f32 %v95, %v90
    %v97 = vld [vmem:[#allocation7] sm:$0xff]
    %vm98 = vcmask 1041408
    %v99 = vsel %vm98, %v96, 0.0
    %100 = vadd.xlane.f32.xlu0 %v99
    %v101 = vpop.xlane.xlu0 %100
    %v102 = vrot.slane %v101, 4
    %v103 = vadd.f32 %v101, %v102
    %v104 = vrot.slane %v103, 2
    %v105 = vadd.f32 %v103, %v104
    %v106 = vrot.slane %v105, 1
    %v107 = vadd.f32 %v105, %v106
    %s108 = vtos %v107
    %v109 = vstv %s108
    %v110 = vsel %vm47, %v109, 0.0
    %v111 = vadd.f32 %v97, %v110
    %112 = vst [vmem:[#allocation7] sm:$0xff] %v111
    %s113 = scalar_lea.vmem [#allocation5], 2
    %v114 = vld [vmem:[%s113] sm:$0x3]
    %s115 = scalar_lea.vmem [#allocation2], 8
    %v116 = vld [vmem:[%s115] sm:$0x3]
    %s117 = scalar_lea.vmem [#allocation2], 10
    %v118 = vld [vmem:[%s117] sm:$0x3]
    %v119 = vmax.f32 %v116, %v118
    %s120 = scalar_lea.vmem [#allocation2], 12
    %v121 = vld [vmem:[%s120] sm:$0x3]
    %v122 = vmax.f32 %v119, %v121
    %s123 = scalar_lea.vmem [#allocation2], 14
    %v124 = vld [vmem:[%s123] sm:$0x3]
    %v125 = vmax.f32 %v122, %v124
    %v126 = vsub.f32 %v116, %v125
    %v127 = vmul.f32 %v126, 1.442695
    %v128 = vpow.pop %v127
    %v129 = vadd.f32 %v128, 0.0
    %vm130 = vcmp.eq.s32.totalorder %v114, 0
    %v131 = vsel %vm130, %v126, 0.0
    %v132 = vsel %vm130, 0.1, 0.0
    %v133 = vsub.f32 %v118, %v125
    %v134 = vmul.f32 %v133, 1.442695
    %v135 = vpow.pop %v134
    %v136 = vadd.f32 %v129, %v135
    %vm137 = vcmp.eq.s32.totalorder %v114, 1
    %v138 = vsel %vm137, %v133, %v131
    %v139 = vsel %vm137, 0.2, %v132
    %v140 = vsub.f32 %v121, %v125
    %v141 = vmul.f32 %v140, 1.442695
    %v142 = vpow.pop %v141
    %v143 = vadd.f32 %v136, %v142
    %vm144 = vcmp.eq.s32.totalorder %v114, 2
    %v145 = vsel %vm144, %v140, %v138
    %v146 = vsel %vm144, 0.3, %v139
    %v147 = vsub.f32 %v124, %v125
    %v148 = vmul.f32 %v147, 1.442695
    %v149 = vpow.pop %v148
    %v150 = vadd.f32 %v143, %v149
    %vm151 = vcmp.eq.s32.totalorder %v114, 3
    %v152 = vsel %vm151, %v147, %v145
    %v153 = vsel %vm151, 0.4, %v146
    %v154 = vlog2.pop %v150
    %v155 = vmul.f32 %v154, 0.6931472
    %v156 = vsub.f32 %v152, %v155
    %v157 = vmul.f32 %v156, %v153
    %v158 = vmul.f32 %v156, 1.442695
    %v159 = vpow.pop %v158
    %v160 = vsub.f32 1.0, %v159
    %v161 = vmul.f32 %v160, %v160
    %v162 = vsub.f32 0.0, %v161
    %v163 = vmul.f32 %v162, %v157
    %v164 = vld [vmem:[#allocation7] sm:$0xff]
    %v165 = vsel %vm98, %v163, 0.0
    %166 = vadd.xlane.f32.xlu0 %v165
    %v167 = vpop.xlane.xlu0 %166
    %v168 = vrot.slane %v167, 4
    %v169 = vadd.f32 %v167, %v168
    %v170 = vrot.slane %v169, 2
    %v171 = vadd.f32 %v169, %v170
    %v172 = vrot.slane %v171, 1
    %v173 = vadd.f32 %v171, %v172
    %s174 = vtos %v173
    %v175 = vstv %s174
    %v176 = vsel %vm47, %v175, 0.0
    %v177 = vadd.f32 %v164, %v176
    %178 = vst [vmem:[#allocation7] sm:$0xff] %v177
    // Predicated region
    $region18: #{tpu_custom_call.1} parent=1 // pred_check
      _
    $region19: #{tpu_custom_call.1} parent=1 // pred_check_branch
      %180 = sbr.rel (0) target = $region21
    $region20: #{tpu_custom_call.1} parent=1 // pred_region
      %s182 = ssub.s32 128, 128
      %183 = vsyncadd [#allocation4], %s182
      %s185 = sshll.u32 [#allocation7], 4
      %s186 = int_to_ptr.vmem [resolvable:$true] %s185
      %188 = dma.vmem_to_hbm [thread:$0]  %s186, 128, %s2, [#allocation4]
    $region21: #{tpu_custom_call.1} parent=1 // pred_fallthru
      _
    // Predicated region
    $region22: #{tpu_custom_call.1} parent=1 // pred_check
      _
    $region23: #{tpu_custom_call.1} parent=1 // pred_check_branch
      %190 = sbr.rel (0) target = $region25
    $region24: #{tpu_custom_call.1} parent=1 // pred_region
      %191 = dma.done [#allocation4], 128
    $region25: #{tpu_custom_call.1} parent=1 // pred_fallthru
      _
    %192 = vsyncpa [#allocation3], 1
    %193 = vsyncpa [#allocation6], 1
    %194 = vsyncpa [#allocation4], 1

</llo_original>
